<compile_context>
chip_gen: v5e
topology: v5e:2x2
jax: 0.10.0
libtpu: 0.0.40
codegen_flags: <defaults>
</compile_context>

<pallas_src>
import numpy as np
import jax
import jax.numpy as jnp
from jax.experimental import pallas as pl
from jax.experimental.pallas import tpu as pltpu

NUM_CLASSES = 10
LANE = 128       # lane-dense padded class dimension (multiple of 128)
MAX_TB = 2048    # max batch-tile rows (review: 1024-2048; ~6.5 MiB VMEM worst case)


def precompute_adjacency_images(img_size: int) -> np.ndarray:
    """NumPy port of BorisGraphNet.precompute_adjacency_images (no torch)."""
    col, row = np.meshgrid(np.arange(img_size), np.arange(img_size))
    coord = np.stack((col, row), axis=2).reshape(-1, 2) / img_size  # (N, 2)
    diff = coord[:, None, :] - coord[None, :, :]
    dist = np.sqrt((diff ** 2).sum(-1))                              # cdist, euclidean
    sigma = 0.05 * np.pi
    A = np.exp(-dist / sigma ** 2)
    A[A < 0.01] = 0.0
    A = A.astype(np.float32)
    D = A.sum(1)
    D_hat = (D + 1e-05) ** (-0.5)
    A_hat = D_hat.reshape(-1, 1) * A * D_hat.reshape(1, -1)
    A_hat[A_hat > 0.0001] = A_hat[A_hat > 0.0001] - 0.2
    return A_hat.astype(np.float32)


def fold_params(A: jax.Array, W: jax.Array) -> jax.Array:
    """Fold fc weight and adjacency into one lane-dense (N, 128) matrix.

    out = (x @ A.T) @ W.T = x @ (W @ A).T.  Call ONCE per parameter set and
    reuse the result across forward calls (this is an explicit precompute, not
    something that folds away when A/W are traced jit arguments).
    """
    A = jnp.asarray(A, jnp.float32)
    W = jnp.asarray(W, jnp.float32)
    C = (W @ A).T                                               # (N, 10)
    return jnp.pad(C, ((0, 0), (0, LANE - NUM_CLASSES)))        # (N, 128)


def _round_up(x: int, m: int) -> int:
    return -(-x // m) * m


def _pick_tile(B: int) -> tuple[int, int]:
    """Return (tile_rows, padded_batch)."""
    if B <= 512:
        # Tiny batch: one tile, grid=(1,).  Per-step overhead dominates anyway,
        # so splitting further only adds cost.
        tb = max(8, _round_up(B, 8))
    else:
        # At least 2 grid steps (so the "parallel" axis actually uses both
        # TensorCores on v7x), tiles capped at MAX_TB rows, padding waste kept
        # small by dividing the batch as evenly as possible.
        n_tiles = max(2, -(-B // MAX_TB))
        tb = min(MAX_TB, _round_up(-(-B // n_tiles), 8))
    return tb, _round_up(B, tb)


def _graphnet_kernel(x_ref, c_ref, o_ref):
    # x_ref: (TB, N)   c_ref: (N, LANE)   o_ref: (TB, LANE)
    # bf16 inputs on the MXU (cast is VPU work hidden under the x DMA on this
    # HBM-bound kernel), f32 accumulation, unmasked lane-dense 128-wide store.
    o_ref[...] = jnp.dot(
        x_ref[...].astype(jnp.bfloat16),
        c_ref[...].astype(jnp.bfloat16),
        preferred_element_type=jnp.float32,
    )


def boris_graphnet_forward(x_nchw: jax.Array, C_padded: jax.Array,
                           *, slice_output: bool = True) -> jax.Array:
    """x_nchw: (B, 1, H, W) float32; C_padded: (N, 128) from fold_params.

    Returns (B, 10) logits (or the padded (B_pad, 128) slab if
    slice_output=False, letting the consumer fuse the slice).
    """
    B = x_nchw.shape[0]
    N = C_padded.shape[0]
    x_flat = x_nchw.reshape(B, N).astype(jnp.float32)   # matches torch .view(B, -1)

    tb, B_pad = _pick_tile(B)
    if B_pad != B:
        x_flat = jnp.pad(x_flat, ((0, B_pad - B), (0, 0)))

    cost = pl.CostEstimate(
        flops=2 * B_pad * N * LANE,
        transcendentals=0,
        bytes_accessed=4 * (B_pad * N + N * LANE + B_pad * LANE),
    )

    out_padded = pl.pallas_call(
        _graphnet_kernel,
        out_shape=jax.ShapeDtypeStruct((B_pad, LANE), jnp.float32),
        grid=(B_pad // tb,),
        in_specs=[
            pl.BlockSpec((tb, N), lambda b: (b, 0)),     # batch tile of x
            pl.BlockSpec((N, LANE), lambda b: (0, 0)),   # folded weight, resident
        ],
        out_specs=pl.BlockSpec((tb, LANE), lambda b: (b, 0)),
        compiler_params=pltpu.CompilerParams(
            # Batch axis is independent -> shards across both TCs on v7x.
            dimension_semantics=("parallel",),
        ),
        cost_estimate=cost,
    )(x_flat, C_padded)

    if slice_output:
        return out_padded[:B, :NUM_CLASSES]
    return out_padded


if __name__ == "__main__":
    img_size = 16           # N = 256 (small, everything VMEM-resident)
    batch = 2
    N = img_size ** 2

    # Deterministic parameters / buffers.
    A_np = precompute_adjacency_images(img_size)            # (N, N) float32
    key = jax.random.PRNGKey(0)
    k_w, k_x = jax.random.split(key)
    # nn.Linear(N, 10, bias=False) weight shape: (10, N)
    W = jax.random.normal(k_w, (NUM_CLASSES, N), dtype=jnp.float32) * (1.0 / np.sqrt(N))
    A = jnp.asarray(A_np)

    # Fold the parameters ONCE (outside the per-batch forward).
    C_padded = jax.block_until_ready(fold_params(A, W))      # (N, 128)

    # Example input: NCHW like the PyTorch module (MNIST-style single channel).
    x = jax.random.normal(k_x, (batch, 1, img_size, img_size), dtype=jnp.float32)

    out = boris_graphnet_forward(x, C_padded)
    out = jax.block_until_ready(out)

    # Pure-JAX reference matching the original two-matmul torch formulation.
    x_flat = x.reshape(batch, N)
    ref = (x_flat @ A.T) @ W.T
    # Reassociated matmul + bf16 MXU inputs (f32 accumulation) -> looser tol.
    np.testing.assert_allclose(np.asarray(out), np.asarray(ref), rtol=2e-2, atol=2e-2)

    assert out.shape == (batch, NUM_CLASSES)
    print("KERNEL_OK")
</pallas_src>

<mosaic_0001>
module attributes {stable_mosaic.version = 11 : i64} {
  func.func @_graphnet_kernel(%arg0: i32, %arg1: memref<8x256xf32, #tpu.memory_space<vmem>>, %arg2: memref<256x128xf32, #tpu.memory_space<vmem>>, %arg3: memref<8x128xf32, #tpu.memory_space<vmem>>) attributes {dimension_semantics = [#tpu.dimension_semantics<parallel>], iteration_bounds = array<i64: 1>, scalar_prefetch = 0 : i64, scratch_operands = 0 : i64, tpu.core_type = #tpu.core_type<tc>, window_params = [{transform_indices = @transform_0, window_bounds = array<i64: 8, 256>}, {pipeline_mode = #tpu.pipeline_mode<synchronous>, transform_indices = @transform_1, window_bounds = array<i64: 256, 128>}, {transform_indices = @transform_2, window_bounds = array<i64: 8, 128>}]} {
    %c0 = arith.constant 0 : index
    %c0_0 = arith.constant 0 : index
    %0 = vector.load %arg1[%c0, %c0_0] : memref<8x256xf32, #tpu.memory_space<vmem>>, vector<8x256xf32>
    %1 = arith.truncf %0 : vector<8x256xf32> to vector<8x256xbf16>
    %c0_1 = arith.constant 0 : index
    %c0_2 = arith.constant 0 : index
    %2 = vector.load %arg2[%c0_1, %c0_2] : memref<256x128xf32, #tpu.memory_space<vmem>>, vector<256x128xf32>
    %3 = arith.truncf %2 : vector<256x128xf32> to vector<256x128xbf16>
    %cst = arith.constant dense<0.000000e+00> : vector<8x128xf32>
    %4 = tpu.matmul %1, %3, %cst {dimension_numbers = #tpu.dot_dimension_numbers<[1], [0], [0], [1], [0, 0, 1, 1], [], []>} : vector<8x256xbf16>, vector<256x128xbf16>, vector<8x128xf32> -> vector<8x128xf32>
    %c0_3 = arith.constant 0 : index
    %c0_4 = arith.constant 0 : index
    %5 = vector.load %arg3[%c0_3, %c0_4] : memref<8x128xf32, #tpu.memory_space<vmem>>, vector<8x128xf32>
    tpu.vector_store %arg3[%c0_3, %c0_4], %4 {strides = array<i32>} : memref<8x128xf32, #tpu.memory_space<vmem>>, vector<8x128xf32>,
    return
  }
  func.func @transform_0(%arg0: i32) -> (i32, i32) {
    %c0_i32 = arith.constant 0 : i32
    %c0_i32_0 = arith.constant 0 : i32
    return %arg0, %c0_i32 : i32, i32
  }
  func.func @transform_1(%arg0: i32) -> (i32, i32) {
    %c0_i32 = arith.constant 0 : i32
    %c0_i32_0 = arith.constant 0 : i32
    %c0_i32_1 = arith.constant 0 : i32
    return %c0_i32, %c0_i32_0 : i32, i32
  }
  func.func @transform_2(%arg0: i32) -> (i32, i32) {
    %c0_i32 = arith.constant 0 : i32
    %c0_i32_0 = arith.constant 0 : i32
    return %arg0, %c0_i32 : i32, i32
  }
}

</mosaic_0001>

<llo_original>
// kernel: tpu_custom_call.1
$region0: #{tpu_custom_call.1}
  #allocation0 [shape = 'u32[]', space=smem, size = 0x4, offset = 0x4, fixed_abs, tag = 'smem constant byte address 0x4 - core index']
  #allocation1 [shape = 'u32[72,128]{1,0:T(1,128)}', space=vmem, size = 0x9000, scoped, tag = 'internal scratch']
  %s0 = inlined_call_operand.hbm [shape: f32[8,256], index: 0, kind: input, shape index: {}]
  %s1 = inlined_call_operand.hbm [shape: f32[256,128], index: 1, kind: input, shape index: {}]
  %s2 = inlined_call_operand.hbm [shape: f32[8,128], index: 2, kind: output, shape index: {}]
  %s3 = sld [smem:[#allocation0]]
  $region26: #{tpu_custom_call.1} parent=0
    _
  %s5 = ssub.s32 1, %s3
  %s6 = scalar_select 0, %s5, %s3
  $region1: #{tpu_custom_call.1} parent=0
    #allocation2 [shape = 'u8[8192]{0}', space=vmem, size = 0x2000, scoped, tag = 'input window, operand 0, single buffered']
    #allocation3 [shape = 's32[1]{0}', space=sflag, size = 0x4, scoped, tag = 'scoped memory for tpu_custom_call.1']
    #allocation4 [shape = 's32[1]{0}', space=sflag, size = 0x4, scoped, tag = 'scoped memory for tpu_custom_call.1']
    #allocation5 [shape = 'u8[131072]{0}', space=vmem, size = 0x20000, scoped, tag = 'input window, operand 1, single buffered']
    #allocation6 [shape = 's32[1]{0}', space=sflag, size = 0x4, scoped, tag = 'scoped memory for tpu_custom_call.1']
    #allocation7 [shape = 'u8[4096]{0}', space=vmem, size = 0x1000, scoped, tag = 'output window, operand 0, single buffered']
    %7 = vsyncpa [#allocation3], 0
    %8 = vsyncpa [#allocation6], 0
    %9 = vsyncpa [#allocation4], 0
    // Predicated region
    $region2: #{tpu_custom_call.1} parent=1 // pred_check
      _
    $region3: #{tpu_custom_call.1} parent=1 // pred_check_branch
      %11 = sbr.rel (0) target = $region5
    $region4: #{tpu_custom_call.1} parent=1 // pred_region
      %13 = vsyncadd [#allocation3], 0
      %s15 = sshll.u32 %s0, 4
      %s16 = int_to_ptr.hbm [resolvable:$true] %s15
      %s17 = sshll.u32 [#allocation2], 4
      %s18 = int_to_ptr.vmem [resolvable:$true] %s17
      %20 = dma.hbm_to_vmem [thread:$0]  %s16, 256, %s18, [#allocation3]
    $region5: #{tpu_custom_call.1} parent=1 // pred_fallthru
      _
    // Predicated region
    $region6: #{tpu_custom_call.1} parent=1 // pred_check
      _
    $region7: #{tpu_custom_call.1} parent=1 // pred_check_branch
      %22 = sbr.rel (0) target = $region9
    $region8: #{tpu_custom_call.1} parent=1 // pred_region
      %24 = vsyncadd [#allocation6], 0
      %s25 = sshll.u32 %s1, 4
      %s26 = int_to_ptr.hbm [resolvable:$true] %s25
      %s27 = sshll.u32 [#allocation5], 4
      %s28 = int_to_ptr.vmem [resolvable:$true] %s27
      %33 = dma.hbm_to_vmem [thread:$0]  %s26, 4096, %s28, [#allocation6], 128, 128, 8
    $region9: #{tpu_custom_call.1} parent=1 // pred_fallthru
      _
    // Predicated region
    $region10: #{tpu_custom_call.1} parent=1 // pred_check
      _
    $region11: #{tpu_custom_call.1} parent=1 // pred_check_branch
      %35 = sbr.rel (0) target = $region13
    $region12: #{tpu_custom_call.1} parent=1 // pred_region
      %37 = dma.done [#allocation3], 256
    $region13: #{tpu_custom_call.1} parent=1 // pred_fallthru
      _
    // Predicated region
    $region14: #{tpu_custom_call.1} parent=1 // pred_check
      _
    $region15: #{tpu_custom_call.1} parent=1 // pred_check_branch
      %39 = sbr.rel (0) target = $region17
    $region16: #{tpu_custom_call.1} parent=1 // pred_region
      %41 = dma.done [#allocation6], 4096
    $region17: #{tpu_custom_call.1} parent=1 // pred_fallthru
      _
    %v42 = vld [vmem:[#allocation2] sm:$0xff]
    %v43 = vld [vmem:[#allocation2 + $0x8] sm:$0xff]
    %v44 = vpack.c.bf16 %v42, %v42
    %v45 = vpack.c.bf16 %v43, %v43
    %v46 = vld [vmem:[#allocation5] sm:$0xff]
    %v47 = vld [vmem:[#allocation5 + $0x8] sm:$0xff]
    %v48 = vld [vmem:[#allocation5 + $0x10] sm:$0xff]
    %v49 = vld [vmem:[#allocation5 + $0x18] sm:$0xff]
    %v50 = vld [vmem:[#allocation5 + $0x20] sm:$0xff]
    %v51 = vld [vmem:[#allocation5 + $0x28] sm:$0xff]
    %v52 = vld [vmem:[#allocation5 + $0x30] sm:$0xff]
    %v53 = vld [vmem:[#allocation5 + $0x38] sm:$0xff]
    %v54 = vld [vmem:[#allocation5 + $0x40] sm:$0xff]
    %v55 = vld [vmem:[#allocation5 + $0x48] sm:$0xff]
    %v56 = vld [vmem:[#allocation5 + $0x50] sm:$0xff]
    %v57 = vld [vmem:[#allocation5 + $0x58] sm:$0xff]
    %v58 = vld [vmem:[#allocation5 + $0x60] sm:$0xff]
    %v59 = vld [vmem:[#allocation5 + $0x68] sm:$0xff]
    %v60 = vld [vmem:[#allocation5 + $0x70] sm:$0xff]
    %v61 = vld [vmem:[#allocation5 + $0x78] sm:$0xff]
    %v62 = vld [vmem:[#allocation5 + $0x80] sm:$0xff]
    %v63 = vld [vmem:[#allocation5 + $0x88] sm:$0xff]
    %v64 = vld [vmem:[#allocation5 + $0x90] sm:$0xff]
    %v65 = vld [vmem:[#allocation5 + $0x98] sm:$0xff]
    %v66 = vld [vmem:[#allocation5 + $0xa0] sm:$0xff]
    %v67 = vld [vmem:[#allocation5 + $0xa8] sm:$0xff]
    %v68 = vld [vmem:[#allocation5 + $0xb0] sm:$0xff]
    %v69 = vld [vmem:[#allocation5 + $0xb8] sm:$0xff]
    %v70 = vld [vmem:[#allocation5 + $0xc0] sm:$0xff]
    %v71 = vld [vmem:[#allocation5 + $0xc8] sm:$0xff]
    %v72 = vld [vmem:[#allocation5 + $0xd0] sm:$0xff]
    %v73 = vld [vmem:[#allocation5 + $0xd8] sm:$0xff]
    %v74 = vld [vmem:[#allocation5 + $0xe0] sm:$0xff]
    %v75 = vld [vmem:[#allocation5 + $0xe8] sm:$0xff]
    %v76 = vld [vmem:[#allocation5 + $0xf0] sm:$0xff]
    %v77 = vld [vmem:[#allocation5 + $0xf8] sm:$0xff]
    %v78 = vpack.c.bf16 %v47, %v46
    %v79 = vpack.c.bf16 %v49, %v48
    %v80 = vpack.c.bf16 %v51, %v50
    %v81 = vpack.c.bf16 %v53, %v52
    %v82 = vpack.c.bf16 %v55, %v54
    %v83 = vpack.c.bf16 %v57, %v56
    %v84 = vpack.c.bf16 %v59, %v58
    %v85 = vpack.c.bf16 %v61, %v60
    %v86 = vpack.c.bf16 %v63, %v62
    %v87 = vpack.c.bf16 %v65, %v64
    %v88 = vpack.c.bf16 %v67, %v66
    %v89 = vpack.c.bf16 %v69, %v68
    %v90 = vpack.c.bf16 %v71, %v70
    %v91 = vpack.c.bf16 %v73, %v72
    %v92 = vpack.c.bf16 %v75, %v74
    %v93 = vpack.c.bf16 %v77, %v76
    %94 = vmatpush.bf16.msra.mxu0 %v85
    %95 = vmatpush.bf16.msra.mxu0 %v84
    %96 = vmatpush.bf16.msra.mxu0 %v83
    %97 = vmatpush.bf16.msra.mxu0 %v82
    %98 = vmatpush.bf16.msra.mxu0 %v81
    %99 = vmatpush.bf16.msra.mxu0 %v80
    %100 = vmatpush.bf16.msra.mxu0 %v79
    %101 = vmatpush.bf16.msra.mxu0 %v78
    %102 = vmatmul.bf16.gmra.mxu0 %v44
    %v103 = vpop.f32.mrf.mxu0
    %v104 = vadd.f32 0.0, %v103
    %v105 = vpop.f32.mrf.mxu0
    %106 = vdwg.mxu0
    %107 = vmatpush.bf16.msra.mxu0 %v93
    %108 = vmatpush.bf16.msra.mxu0 %v92
    %109 = vmatpush.bf16.msra.mxu0 %v91
    %110 = vmatpush.bf16.msra.mxu0 %v90
    %111 = vmatpush.bf16.msra.mxu0 %v89
    %112 = vmatpush.bf16.msra.mxu0 %v88
    %113 = vmatpush.bf16.msra.mxu0 %v87
    %114 = vmatpush.bf16.msra.mxu0 %v86
    %115 = vmatmul.bf16.gmra.mxu0 %v45
    %v116 = vpop.f32.mrf.mxu0
    %v117 = vadd.f32 %v104, %v116
    %v118 = vpop.f32.mrf.mxu0
    %119 = vdwg.mxu0
    %120 = vst [vmem:[#allocation7] sm:$0xff] %v117
    // Predicated region
    $region18: #{tpu_custom_call.1} parent=1 // pred_check
      _
    $region19: #{tpu_custom_call.1} parent=1 // pred_check_branch
      %122 = sbr.rel (0) target = $region21
    $region20: #{tpu_custom_call.1} parent=1 // pred_region
      %124 = vsyncadd [#allocation4], 0
      %s126 = sshll.u32 [#allocation7], 4
      %s127 = int_to_ptr.vmem [resolvable:$true] %s126
      %s128 = sshll.u32 %s2, 4
      %s129 = int_to_ptr.hbm [resolvable:$true] %s128
      %131 = dma.vmem_to_hbm [thread:$0]  %s127, 128, %s129, [#allocation4]
    $region21: #{tpu_custom_call.1} parent=1 // pred_fallthru
      _
    // Predicated region
    $region22: #{tpu_custom_call.1} parent=1 // pred_check
      _
    $region23: #{tpu_custom_call.1} parent=1 // pred_check_branch
      %133 = sbr.rel (0) target = $region25
    $region24: #{tpu_custom_call.1} parent=1 // pred_region
      %135 = dma.done [#allocation4], 128
    $region25: #{tpu_custom_call.1} parent=1 // pred_fallthru
      _
    %136 = vsyncpa [#allocation3], 1
    %137 = vsyncpa [#allocation6], 1
    %138 = vsyncpa [#allocation4], 1

</llo_original>
